<compile_context>
chip_gen: v7x
topology: tpu7x:2x2x1
jax: 0.10.0
libtpu: 0.0.40
codegen_flags: <defaults>
</compile_context>

<pallas_src>
import jax
import jax.numpy as jnp
from jax.experimental import pallas as pl
from jax.experimental.pallas import tpu as pltpu


HIDDEN_STATE_SIZE = 48
H_PAD = 128   # hidden dim padded lane-dense
A_PAD = 8     # action dim padded to the f32 sublane minimum (was 128)


def _forward_kernel(state_ref, action_ref, w1s_ref, w1a_ref, w2_ref, o_ref):
    # state_ref : [TB, E]       (f32 activations streamed per batch tile)
    # action_ref: [TB, 1] int32
    # w1s_ref   : [E, H_PAD]     state part of W1 (zero-padded cols), VMEM resident
    # w1a_ref   : [A_PAD, H_PAD] action part of W1 with b1 folded into rows
    # w2_ref    : [H_PAD, E]     zero-padded rows
    # o_ref     : [TB, E]
    w_dtype = w1s_ref.dtype
    state = state_ref[...].astype(w_dtype)                    # [TB, E]
    act = action_ref[...]                                     # [TB, 1] int32
    tb = state.shape[0]

    # one-hot(action) built in-kernel (iota compare), only A_PAD=8 wide.
    lane_ids = jax.lax.broadcasted_iota(jnp.int32, (tb, A_PAD), 1)
    onehot = (lane_ids == act).astype(w_dtype)                # [TB, A_PAD]

    # h = state @ W1_state + onehot @ (W1_action + b1)   (bias folded)
    h = jnp.dot(state, w1s_ref[...], preferred_element_type=jnp.float32)
    h = h + jnp.dot(onehot, w1a_ref[...], preferred_element_type=jnp.float32)

    # LeakyReLU, negative_slope = 0.01 (PyTorch default), in f32.
    h = jnp.where(h > 0, h, 0.01 * h)

    out = jnp.dot(h.astype(w_dtype), w2_ref[...],
                  preferred_element_type=jnp.float32)
    o_ref[...] = out.astype(o_ref.dtype)


def prepare_params(w1, b1, w2, embedding_units, num_actions, dtype=jnp.float32):
    """Split W1 into state/action parts, fold bias, zero-pad, cast.

    w1: [E+A, H] (in,out layout), b1: [H], w2: [H, E]  ->  (w1s_p, w1a_p, w2_p)
    Zero padding is exact: LeakyReLU(0) = 0 and zero W2 rows contribute nothing.
    dtype=jnp.bfloat16 enables the bf16-weight fast path (f32 accumulation).
    """
    E, A, H = embedding_units, num_actions, w1.shape[1]
    assert A <= A_PAD and H <= H_PAD
    w1s = w1[:E]                       # [E, H]
    w1a = w1[E:E + A] + b1[None, :]    # [A, H]  bias folded (one_hot sums to 1)

    w1s_p = jnp.zeros((E, H_PAD), dtype).at[:, :H].set(w1s.astype(dtype))
    w1a_p = jnp.zeros((A_PAD, H_PAD), dtype).at[:A, :H].set(w1a.astype(dtype))
    w2_p = jnp.zeros((H_PAD, E), dtype).at[:H, :].set(w2.astype(dtype))
    return w1s_p, w1a_p, w2_p


def _batch_tile(B):
    """Batch tile size: whole batch when small, big lane-friendly tiles + >=2
    grid steps when large (so the 'parallel' axis can shard across TCs)."""
    if B <= 256:
        return B
    tb = min(1024, pl.cdiv(B, 2))
    return max(8, (tb // 8) * 8)


def lunar_forward_model(state_embedding, action, prepared_params):
    """state_embedding: [B, E] f32, action: [B] or [B,1] int -> [B, E] f32."""
    w1s_p, w1a_p, w2_p = prepared_params
    B, E = state_embedding.shape

    TB = _batch_tile(B)
    grid = (pl.cdiv(B, TB),)

    if action.ndim == 1:
        action = action[:, None]
    action = action.astype(jnp.int32)                         # [B, 1]

    def weight_spec(arr):
        # Grid-invariant weights: single-buffered, VMEM resident.
        return pl.BlockSpec(arr.shape, lambda i: (0, 0),
                            pipeline_mode=pl.Buffered(1))

    out = pl.pallas_call(
        _forward_kernel,
        out_shape=jax.ShapeDtypeStruct((B, E), state_embedding.dtype),
        grid=grid,
        in_specs=[
            pl.BlockSpec((TB, E), lambda i: (i, 0)),          # activations stream
            pl.BlockSpec((TB, 1), lambda i: (i, 0)),          # actions stream
            weight_spec(w1s_p),
            weight_spec(w1a_p),
            weight_spec(w2_p),
        ],
        out_specs=pl.BlockSpec((TB, E), lambda i: (i, 0)),
        compiler_params=pltpu.CompilerParams(
            dimension_semantics=("parallel",)),
    )(state_embedding, action, w1s_p, w1a_p, w2_p)
    return out


def init_params(key, embedding_units, num_actions,
                hidden_state_size=HIDDEN_STATE_SIZE):
    """Deterministic synthetic init (PyTorch-Linear-style uniform bounds).

    Returned in [in_features, out_features] layout (transposed vs torch .weight).
    """
    in1 = embedding_units + num_actions
    k1, k2, k3 = jax.random.split(key, 3)
    bound1 = 1.0 / jnp.sqrt(in1)
    bound2 = 1.0 / jnp.sqrt(hidden_state_size)
    w1 = jax.random.uniform(k1, (in1, hidden_state_size), jnp.float32,
                            -bound1, bound1)
    b1 = jax.random.uniform(k2, (hidden_state_size,), jnp.float32,
                            -bound1, bound1)
    w2 = jax.random.uniform(k3, (hidden_state_size, embedding_units),
                            jnp.float32, -bound2, bound2)
    return w1, b1, w2


def _reference(state_embedding, action, w1, b1, w2, num_actions):
    """Pure-JAX reference of the original (unpadded, unfused) math."""
    x = jnp.concatenate(
        [state_embedding, jax.nn.one_hot(action, num_actions, dtype=jnp.float32)],
        axis=-1)
    h = x @ w1 + b1
    h = jnp.where(h > 0, h, 0.01 * h)
    return h @ w2


if __name__ == "__main__":
    # LunarLander-ish shapes: Discrete(4) actions, embedding_units=32, batch=8.
    embedding_units = 32
    num_actions = 4

    key = jax.random.PRNGKey(0)
    k_emb, k_act, k_par = jax.random.split(key, 3)
    w1, b1, w2 = init_params(k_par, embedding_units, num_actions)

    # ---- Test 1: tiny batch, f32 weights (exactness check) --------------
    B = 8
    state_embedding = jax.random.normal(k_emb, (B, embedding_units), jnp.float32)
    action = jax.random.randint(k_act, (B,), 0, num_actions, jnp.int32)

    prepared_f32 = prepare_params(w1, b1, w2, embedding_units, num_actions)
    out = lunar_forward_model(state_embedding, action, prepared_f32)
    jax.block_until_ready(out)

    ref = _reference(state_embedding, action, w1, b1, w2, num_actions)
    assert out.shape == (B, embedding_units)
    assert jnp.allclose(out, ref, atol=1e-4, rtol=1e-4), (
        float(jnp.max(jnp.abs(out - ref))))

    # ---- Test 2: bf16-weight fast path (loose tolerance) -----------------
    prepared_bf16 = prepare_params(w1, b1, w2, embedding_units, num_actions,
                                   dtype=jnp.bfloat16)
    out_bf16 = lunar_forward_model(state_embedding, action, prepared_bf16)
    jax.block_until_ready(out_bf16)
    assert jnp.allclose(out_bf16, ref, atol=8e-2, rtol=5e-2), (
        float(jnp.max(jnp.abs(out_bf16 - ref))))

    # ---- Test 3: larger batch, non-multiple of tile (partial last tile,
    #              >= 2 grid steps so the parallel axis has work to shard) --
    B2 = 300
    k_emb2, k_act2 = jax.random.split(jax.random.PRNGKey(1))
    state2 = jax.random.normal(k_emb2, (B2, embedding_units), jnp.float32)
    action2 = jax.random.randint(k_act2, (B2,), 0, num_actions, jnp.int32)
    out2 = lunar_forward_model(state2, action2, prepared_f32)
    jax.block_until_ready(out2)
    ref2 = _reference(state2, action2, w1, b1, w2, num_actions)
    assert out2.shape == (B2, embedding_units)
    assert jnp.allclose(out2, ref2, atol=1e-4, rtol=1e-4), (
        float(jnp.max(jnp.abs(out2 - ref2))))

    print("KERNEL_OK")
</pallas_src>

<mosaic_0001>
module attributes {stable_mosaic.version = 11 : i64} {
  func.func @_forward_kernel(%arg0: i32, %arg1: memref<8x32xf32, #tpu.memory_space<vmem>>, %arg2: memref<8x1xi32, #tpu.memory_space<vmem>>, %arg3: memref<32x128xf32, #tpu.memory_space<vmem>>, %arg4: memref<8x128xf32, #tpu.memory_space<vmem>>, %arg5: memref<128x32xf32, #tpu.memory_space<vmem>>, %arg6: memref<8x32xf32, #tpu.memory_space<vmem>>) attributes {dimension_semantics = [#tpu.dimension_semantics<parallel>], iteration_bounds = array<i64: 1>, scalar_prefetch = 0 : i64, scratch_operands = 0 : i64, tpu.core_type = #tpu.core_type<tc>, window_params = [{transform_indices = @transform_0, window_bounds = array<i64: 8, 32>}, {transform_indices = @transform_1, window_bounds = array<i64: 8, 1>}, {pipeline_mode = #tpu.pipeline_mode<synchronous>, transform_indices = @transform_2, window_bounds = array<i64: 32, 128>}, {pipeline_mode = #tpu.pipeline_mode<synchronous>, transform_indices = @transform_3, window_bounds = array<i64: 8, 128>}, {pipeline_mode = #tpu.pipeline_mode<synchronous>, transform_indices = @transform_4, window_bounds = array<i64: 128, 32>}, {transform_indices = @transform_5, window_bounds = array<i64: 8, 32>}]} {
    %c0 = arith.constant 0 : index
    %c0_0 = arith.constant 0 : index
    %0 = vector.load %arg1[%c0, %c0_0] : memref<8x32xf32, #tpu.memory_space<vmem>>, vector<8x32xf32>
    %c0_1 = arith.constant 0 : index
    %c0_2 = arith.constant 0 : index
    %1 = vector.load %arg2[%c0_1, %c0_2] : memref<8x1xi32, #tpu.memory_space<vmem>>, vector<8x1xi32>
    %2 = tpu.iota {dimensions = array<i32: 1>} : vector<8x8xi32>
    %3 = vector.broadcast %1 : vector<8x1xi32> to vector<8x8xi32>
    %4 = arith.cmpi eq, %2, %3 : vector<8x8xi32>
    %5 = arith.extui %4 : vector<8x8xi1> to vector<8x8xi32>
    %6 = arith.sitofp %5 : vector<8x8xi32> to vector<8x8xf32>
    %c0_3 = arith.constant 0 : index
    %c0_4 = arith.constant 0 : index
    %7 = vector.load %arg3[%c0_3, %c0_4] : memref<32x128xf32, #tpu.memory_space<vmem>>, vector<32x128xf32>
    %cst = arith.constant dense<0.000000e+00> : vector<8x128xf32>
    %8 = tpu.matmul %0, %7, %cst {dimension_numbers = #tpu.dot_dimension_numbers<[1], [0], [0], [1], [0, 0, 1, 1], [], []>} : vector<8x32xf32>, vector<32x128xf32>, vector<8x128xf32> -> vector<8x128xf32>
    %c0_5 = arith.constant 0 : index
    %c0_6 = arith.constant 0 : index
    %9 = vector.load %arg4[%c0_5, %c0_6] : memref<8x128xf32, #tpu.memory_space<vmem>>, vector<8x128xf32>
    %cst_7 = arith.constant dense<0.000000e+00> : vector<8x128xf32>
    %10 = tpu.matmul %6, %9, %cst_7 {dimension_numbers = #tpu.dot_dimension_numbers<[1], [0], [0], [1], [0, 0, 1, 1], [], []>} : vector<8x8xf32>, vector<8x128xf32>, vector<8x128xf32> -> vector<8x128xf32>
    %11 = arith.addf %8, %10 : vector<8x128xf32>
    %cst_8 = arith.constant 0.000000e+00 : f32
    %12 = vector.broadcast %cst_8 : f32 to vector<8x128xf32>
    %13 = arith.cmpf ogt, %11, %12 : vector<8x128xf32>
    %cst_9 = arith.constant 0.00999999977 : f32
    %14 = vector.broadcast %cst_9 : f32 to vector<8x128xf32>
    %15 = arith.mulf %14, %11 : vector<8x128xf32>
    %16 = arith.select %13, %11, %15 : vector<8x128xi1>, vector<8x128xf32>
    %c0_10 = arith.constant 0 : index
    %c0_11 = arith.constant 0 : index
    %17 = vector.load %arg5[%c0_10, %c0_11] : memref<128x32xf32, #tpu.memory_space<vmem>>, vector<128x32xf32>
    %cst_12 = arith.constant dense<0.000000e+00> : vector<8x32xf32>
    %18 = tpu.matmul %16, %17, %cst_12 {dimension_numbers = #tpu.dot_dimension_numbers<[1], [0], [0], [1], [0, 0, 1, 1], [], []>} : vector<8x128xf32>, vector<128x32xf32>, vector<8x32xf32> -> vector<8x32xf32>
    %c0_13 = arith.constant 0 : index
    %c0_14 = arith.constant 0 : index
    %19 = vector.load %arg6[%c0_13, %c0_14] : memref<8x32xf32, #tpu.memory_space<vmem>>, vector<8x32xf32>
    tpu.vector_store %arg6[%c0_13, %c0_14], %18 {strides = array<i32>} : memref<8x32xf32, #tpu.memory_space<vmem>>, vector<8x32xf32>,
    return
  }
  func.func @transform_0(%arg0: i32) -> (i32, i32) {
    %c0_i32 = arith.constant 0 : i32
    %c0_i32_0 = arith.constant 0 : i32
    return %arg0, %c0_i32 : i32, i32
  }
  func.func @transform_1(%arg0: i32) -> (i32, i32) {
    %c0_i32 = arith.constant 0 : i32
    %c0_i32_0 = arith.constant 0 : i32
    return %arg0, %c0_i32 : i32, i32
  }
  func.func @transform_2(%arg0: i32) -> (i32, i32) {
    %c0_i32 = arith.constant 0 : i32
    %c0_i32_0 = arith.constant 0 : i32
    %c0_i32_1 = arith.constant 0 : i32
    return %c0_i32, %c0_i32_0 : i32, i32
  }
  func.func @transform_3(%arg0: i32) -> (i32, i32) {
    %c0_i32 = arith.constant 0 : i32
    %c0_i32_0 = arith.constant 0 : i32
    %c0_i32_1 = arith.constant 0 : i32
    return %c0_i32, %c0_i32_0 : i32, i32
  }
  func.func @transform_4(%arg0: i32) -> (i32, i32) {
    %c0_i32 = arith.constant 0 : i32
    %c0_i32_0 = arith.constant 0 : i32
    %c0_i32_1 = arith.constant 0 : i32
    return %c0_i32, %c0_i32_0 : i32, i32
  }
  func.func @transform_5(%arg0: i32) -> (i32, i32) {
    %c0_i32 = arith.constant 0 : i32
    %c0_i32_0 = arith.constant 0 : i32
    return %arg0, %c0_i32 : i32, i32
  }
}

</mosaic_0001>

<llo_original>
// kernel: tpu_custom_call.1
$region0: #{tpu_custom_call.1}
  #allocation0 [shape = 'u32[]', space=smem, size = 0x4, offset = 0x4, fixed_abs, tag = 'smem constant byte address 0x4 - core index']
  #allocation1 [shape = 'u32[144,128]{1,0:T(1,128)}', space=vmem, size = 0x12000, scoped, tag = 'internal scratch']
  %s0 = inlined_call_operand.vmem [shape: f32[8,32], index: 0, kind: input, shape index: {}]
  %s1 = inlined_call_operand.vmem [shape: s32[8,1], index: 1, kind: input, shape index: {}]
  %s2 = inlined_call_operand.vmem [shape: f32[32,128], index: 2, kind: input, shape index: {}]
  %s3 = inlined_call_operand.vmem [shape: f32[8,128], index: 3, kind: input, shape index: {}]
  %s4 = inlined_call_operand.vmem [shape: f32[128,32], index: 4, kind: input, shape index: {}]
  %s5 = inlined_call_operand.hbm [shape: f32[8,32], index: 5, kind: output, shape index: {}]
  %s6 = sld [smem:[#allocation0]]
  $region30: #{tpu_custom_call.1} parent=0
    _
  %s8 = ssub.s32 1, %s6
  %s9 = scalar_select 0, %s8, %s6
  $region1: #{tpu_custom_call.1} parent=0
    #allocation2 [shape = 'u8[4096]{0}', space=vmem, size = 0x1000, scoped, tag = 'output window, operand 0, single buffered']
    #allocation3 [shape = 's32[1]{0}', space=sflag, size = 0x4, scoped, tag = 'scoped memory for tpu_custom_call.1']
    %10 = vsyncpa [#allocation3], 0
    // Predicated region
    $region2: #{tpu_custom_call.1} parent=1 // pred_check
      _
    $region3: #{tpu_custom_call.1} parent=1 // pred_check_branch
      %12 = sbr.rel (0) target = $region5
    $region4: #{tpu_custom_call.1} parent=1 // pred_region
      _
    $region5: #{tpu_custom_call.1} parent=1 // pred_fallthru
      _
    // Predicated region
    $region6: #{tpu_custom_call.1} parent=1 // pred_check
      _
    $region7: #{tpu_custom_call.1} parent=1 // pred_check_branch
      %14 = sbr.rel (0) target = $region9
    $region8: #{tpu_custom_call.1} parent=1 // pred_region
      _
    $region9: #{tpu_custom_call.1} parent=1 // pred_fallthru
      _
    // Predicated region
    $region10: #{tpu_custom_call.1} parent=1 // pred_check
      _
    $region11: #{tpu_custom_call.1} parent=1 // pred_check_branch
      %16 = sbr.rel (0) target = $region13
    $region12: #{tpu_custom_call.1} parent=1 // pred_region
      _
    $region13: #{tpu_custom_call.1} parent=1 // pred_fallthru
      _
    // Predicated region
    $region14: #{tpu_custom_call.1} parent=1 // pred_check
      _
    $region15: #{tpu_custom_call.1} parent=1 // pred_check_branch
      %18 = sbr.rel (0) target = $region17
    $region16: #{tpu_custom_call.1} parent=1 // pred_region
      _
    $region17: #{tpu_custom_call.1} parent=1 // pred_fallthru
      _
    // Predicated region
    $region18: #{tpu_custom_call.1} parent=1 // pred_check
      _
    $region19: #{tpu_custom_call.1} parent=1 // pred_check_branch
      %20 = sbr.rel (0) target = $region21
    $region20: #{tpu_custom_call.1} parent=1 // pred_region
      _
    $region21: #{tpu_custom_call.1} parent=1 // pred_fallthru
      _
    %v21 = vld [vmem:[%s0] sm:$0xff]
    %v22 = vld [vmem:[%s1] sm:$0xff]
    %v23 = vlaneseq
    %v24 = vand.u32 %v23, 127
    %25 = vset.pattern.permute.xlu0 0
    %26 = vperm.xlu0 %25, %v22
    %v27 = vpop.permute.xlu0 %26
    %vm28 = vcmp.eq.s32.totalorder %v24, %v27
    %v29 = vsel %vm28, 1, 0
    %v30 = vcvt.s32.f32 %v29
    %v31 = vld [vmem:[%s2] sm:$0xff]
    %v32 = vld [vmem:[%s2 + $0x8] sm:$0xff]
    %v33 = vld [vmem:[%s2 + $0x10] sm:$0xff]
    %v34 = vld [vmem:[%s2 + $0x18] sm:$0xff]
    %v35 = vld [vmem:[%s3] sm:$0xff]
    %vm36 = vcmask 64512
    %v38 = vsel %vm36, %v30, 0
    %40 = vmatprep.subr.mxu0 0.0
    %41 = vmatpush1.msra.mxu0 %v35
    %42 = vmatprep.subr.mxu0 0.0
    %43 = vmatpush1.msra.mxu0 0.0
    %44 = vmatprep.subr.mxu0 0.0
    %45 = vmatpush1.msra.mxu0 0.0
    %46 = vmatprep.subr.mxu0 0.0
    %47 = vmatpush1.msra.mxu0 0.0
    %48 = vmatprep.subr.mxu0 0.0
    %49 = vmatpush1.msra.mxu0 0.0
    %50 = vmatprep.subr.mxu0 0.0
    %51 = vmatpush1.msra.mxu0 0.0
    %52 = vmatprep.subr.mxu0 0.0
    %53 = vmatpush1.msra.mxu0 0.0
    %54 = vmatprep.subr.mxu0 0.0
    %55 = vmatpush1.msra.mxu0 0.0
    %56 = vmatprep.subr.mxu0 0.0
    %57 = vmatpush1.msra.mxu0 0.0
    %58 = vmatprep.subr.mxu0 0.0
    %59 = vmatpush1.msra.mxu0 0.0
    %60 = vmatprep.subr.mxu0 0.0
    %61 = vmatpush1.msra.mxu0 0.0
    %62 = vmatprep.subr.mxu0 0.0
    %63 = vmatpush1.msra.mxu0 0.0
    %64 = vmatprep.subr.mxu0 0.0
    %65 = vmatpush1.msra.mxu0 0.0
    %66 = vmatprep.subr.mxu0 0.0
    %67 = vmatpush1.msra.mxu0 0.0
    %68 = vmatprep.subr.mxu0 0.0
    %69 = vmatpush1.msra.mxu0 0.0
    %70 = vmatprep.subr.mxu0 0.0
    %71 = vmatpush1.msra.mxu0 0.0
    %72 = vmatprep.subr.mxu0 0.0
    %73 = vmatpush1.msra.mxu0 0.0
    %74 = vmatprep.subr.mxu0 0.0
    %75 = vmatpush1.msra.mxu0 0.0
    %76 = vmatprep.subr.mxu0 0.0
    %77 = vmatpush1.msra.mxu0 0.0
    %78 = vmatprep.subr.mxu0 0.0
    %79 = vmatpush1.msra.mxu0 0.0
    %80 = vmatprep.subr.mxu0 0.0
    %81 = vmatpush1.msra.mxu0 0.0
    %82 = vmatprep.subr.mxu0 0.0
    %83 = vmatpush1.msra.mxu0 0.0
    %84 = vmatprep.subr.mxu0 0.0
    %85 = vmatpush1.msra.mxu0 0.0
    %86 = vmatprep.subr.mxu0 0.0
    %87 = vmatpush1.msra.mxu0 0.0
    %88 = vmatprep.subr.mxu0 0.0
    %89 = vmatpush1.msra.mxu0 0.0
    %90 = vmatprep.subr.mxu0 0.0
    %91 = vmatpush1.msra.mxu0 0.0
    %92 = vmatprep.subr.mxu0 0.0
    %93 = vmatpush1.msra.mxu0 0.0
    %94 = vmatprep.subr.mxu0 0.0
    %95 = vmatpush1.msra.mxu0 0.0
    %96 = vmatprep.subr.mxu0 0.0
    %97 = vmatpush1.msra.mxu0 0.0
    %98 = vmatprep.subr.mxu0 0.0
    %99 = vmatpush1.msra.mxu0 0.0
    %100 = vmatprep.subr.mxu0 0.0
    %101 = vmatpush1.msra.mxu0 0.0
    %102 = vmatprep.subr.mxu0 0.0
    %103 = vmatpush1.msra.mxu0 0.0
    %104 = vmatprep.mubr.f32.mxu0 0.0
    %105 = vmatmul.mubr.f32.gmra.mrb[0].mxu0 %v38
    %v106 = vpop.f32.mrb[0].mxu0
    %v107 = vadd.f32 0.0, %v106
    %v108 = vpop.f32.mrb[0].mxu0
    %109 = vdwg.mxu0
    %vm110 = vcmask 261120
    %v112 = vsel %vm110, %v21, 0
    %114 = vmatprep.subr.mxu0 0.0
    %115 = vmatpush1.msra.mxu0 %v31
    %116 = vmatprep.subr.mxu0 0.0
    %117 = vmatpush1.msra.mxu0 %v32
    %118 = vmatprep.subr.mxu0 0.0
    %119 = vmatpush1.msra.mxu0 %v33
    %120 = vmatprep.subr.mxu0 0.0
    %121 = vmatpush1.msra.mxu0 %v34
    %122 = vmatprep.subr.mxu0 0.0
    %123 = vmatpush1.msra.mxu0 0.0
    %124 = vmatprep.subr.mxu0 0.0
    %125 = vmatpush1.msra.mxu0 0.0
    %126 = vmatprep.subr.mxu0 0.0
    %127 = vmatpush1.msra.mxu0 0.0
    %128 = vmatprep.subr.mxu0 0.0
    %129 = vmatpush1.msra.mxu0 0.0
    %130 = vmatprep.subr.mxu0 0.0
    %131 = vmatpush1.msra.mxu0 0.0
    %132 = vmatprep.subr.mxu0 0.0
    %133 = vmatpush1.msra.mxu0 0.0
    %134 = vmatprep.subr.mxu0 0.0
    %135 = vmatpush1.msra.mxu0 0.0
    %136 = vmatprep.subr.mxu0 0.0
    %137 = vmatpush1.msra.mxu0 0.0
    %138 = vmatprep.subr.mxu0 0.0
    %139 = vmatpush1.msra.mxu0 0.0
    %140 = vmatprep.subr.mxu0 0.0
    %141 = vmatpush1.msra.mxu0 0.0
    %142 = vmatprep.subr.mxu0 0.0
    %143 = vmatpush1.msra.mxu0 0.0
    %144 = vmatprep.subr.mxu0 0.0
    %145 = vmatpush1.msra.mxu0 0.0
    %146 = vmatprep.subr.mxu0 0.0
    %147 = vmatpush1.msra.mxu0 0.0
    %148 = vmatprep.subr.mxu0 0.0
    %149 = vmatpush1.msra.mxu0 0.0
    %150 = vmatprep.subr.mxu0 0.0
    %151 = vmatpush1.msra.mxu0 0.0
    %152 = vmatprep.subr.mxu0 0.0
    %153 = vmatpush1.msra.mxu0 0.0
    %154 = vmatprep.subr.mxu0 0.0
    %155 = vmatpush1.msra.mxu0 0.0
    %156 = vmatprep.subr.mxu0 0.0
    %157 = vmatpush1.msra.mxu0 0.0
    %158 = vmatprep.subr.mxu0 0.0
    %159 = vmatpush1.msra.mxu0 0.0
    %160 = vmatprep.subr.mxu0 0.0
    %161 = vmatpush1.msra.mxu0 0.0
    %162 = vmatprep.subr.mxu0 0.0
    %163 = vmatpush1.msra.mxu0 0.0
    %164 = vmatprep.subr.mxu0 0.0
    %165 = vmatpush1.msra.mxu0 0.0
    %166 = vmatprep.subr.mxu0 0.0
    %167 = vmatpush1.msra.mxu0 0.0
    %168 = vmatprep.subr.mxu0 0.0
    %169 = vmatpush1.msra.mxu0 0.0
    %170 = vmatprep.subr.mxu0 0.0
    %171 = vmatpush1.msra.mxu0 0.0
    %172 = vmatprep.subr.mxu0 0.0
    %173 = vmatpush1.msra.mxu0 0.0
    %174 = vmatprep.subr.mxu0 0.0
    %175 = vmatpush1.msra.mxu0 0.0
    %176 = vmatprep.subr.mxu0 0.0
    %177 = vmatpush1.msra.mxu0 0.0
    %178 = vmatprep.mubr.f32.mxu0 0.0
    %179 = vmatmul.mubr.f32.gmra.mrb[0].mxu0 %v112
    %v180 = vpop.f32.mrb[0].mxu0
    %v181 = vadd.f32 %v107, %v180
    %v182 = vpop.f32.mrb[0].mxu0
    %183 = vdwg.mxu0
    %vm184 = vcmp.gt.f32.partialorder %v181, 0.0
    %v185 = vmul.f32 %v181, 0.01
    %v186 = vsel %vm184, %v181, %v185
    %v187 = vld [vmem:[%s4] sm:$0xff]
    %v188 = vld [vmem:[%s4 + $0x8] sm:$0xff]
    %v189 = vld [vmem:[%s4 + $0x10] sm:$0xff]
    %v190 = vld [vmem:[%s4 + $0x18] sm:$0xff]
    %v191 = vld [vmem:[%s4 + $0x20] sm:$0xff]
    %v192 = vld [vmem:[%s4 + $0x28] sm:$0xff]
    %v193 = vld [vmem:[%s4 + $0x30] sm:$0xff]
    %v194 = vld [vmem:[%s4 + $0x38] sm:$0xff]
    %v195 = vld [vmem:[%s4 + $0x40] sm:$0xff]
    %v196 = vld [vmem:[%s4 + $0x48] sm:$0xff]
    %v197 = vld [vmem:[%s4 + $0x50] sm:$0xff]
    %v198 = vld [vmem:[%s4 + $0x58] sm:$0xff]
    %v199 = vld [vmem:[%s4 + $0x60] sm:$0xff]
    %v200 = vld [vmem:[%s4 + $0x68] sm:$0xff]
    %v201 = vld [vmem:[%s4 + $0x70] sm:$0xff]
    %v202 = vld [vmem:[%s4 + $0x78] sm:$0xff]
    %203 = vmatprep.subr.mxu0 0.0
    %204 = vmatpush1.msra.mxu0 %v187
    %205 = vmatprep.subr.mxu0 0.0
    %206 = vmatpush1.msra.mxu0 %v188
    %207 = vmatprep.subr.mxu0 0.0
    %208 = vmatpush1.msra.mxu0 %v189
    %209 = vmatprep.subr.mxu0 0.0
    %210 = vmatpush1.msra.mxu0 %v190
    %211 = vmatprep.subr.mxu0 0.0
    %212 = vmatpush1.msra.mxu0 %v191
    %213 = vmatprep.subr.mxu0 0.0
    %214 = vmatpush1.msra.mxu0 %v192
    %215 = vmatprep.subr.mxu0 0.0
    %216 = vmatpush1.msra.mxu0 %v193
    %217 = vmatprep.subr.mxu0 0.0
    %218 = vmatpush1.msra.mxu0 %v194
    %219 = vmatprep.subr.mxu0 0.0
    %220 = vmatpush1.msra.mxu0 %v195
    %221 = vmatprep.subr.mxu0 0.0
    %222 = vmatpush1.msra.mxu0 %v196
    %223 = vmatprep.subr.mxu0 0.0
    %224 = vmatpush1.msra.mxu0 %v197
    %225 = vmatprep.subr.mxu0 0.0
    %226 = vmatpush1.msra.mxu0 %v198
    %227 = vmatprep.subr.mxu0 0.0
    %228 = vmatpush1.msra.mxu0 %v199
    %229 = vmatprep.subr.mxu0 0.0
    %230 = vmatpush1.msra.mxu0 %v200
    %231 = vmatprep.subr.mxu0 0.0
    %232 = vmatpush1.msra.mxu0 %v201
    %233 = vmatprep.subr.mxu0 0.0
    %234 = vmatpush1.msra.mxu0 %v202
    %235 = vmatprep.subr.mxu0 0.0
    %236 = vmatpush1.msra.mxu0 0.0
    %237 = vmatprep.subr.mxu0 0.0
    %238 = vmatpush1.msra.mxu0 0.0
    %239 = vmatprep.subr.mxu0 0.0
    %240 = vmatpush1.msra.mxu0 0.0
    %241 = vmatprep.subr.mxu0 0.0
    %242 = vmatpush1.msra.mxu0 0.0
    %243 = vmatprep.subr.mxu0 0.0
    %244 = vmatpush1.msra.mxu0 0.0
    %245 = vmatprep.subr.mxu0 0.0
    %246 = vmatpush1.msra.mxu0 0.0
    %247 = vmatprep.subr.mxu0 0.0
    %248 = vmatpush1.msra.mxu0 0.0
    %249 = vmatprep.subr.mxu0 0.0
    %250 = vmatpush1.msra.mxu0 0.0
    %251 = vmatprep.subr.mxu0 0.0
    %252 = vmatpush1.msra.mxu0 0.0
    %253 = vmatprep.subr.mxu0 0.0
    %254 = vmatpush1.msra.mxu0 0.0
    %255 = vmatprep.subr.mxu0 0.0
    %256 = vmatpush1.msra.mxu0 0.0
    %257 = vmatprep.subr.mxu0 0.0
    %258 = vmatpush1.msra.mxu0 0.0
    %259 = vmatprep.subr.mxu0 0.0
    %260 = vmatpush1.msra.mxu0 0.0
    %261 = vmatprep.subr.mxu0 0.0
    %262 = vmatpush1.msra.mxu0 0.0
    %263 = vmatprep.subr.mxu0 0.0
    %264 = vmatpush1.msra.mxu0 0.0
    %265 = vmatprep.subr.mxu0 0.0
    %266 = vmatpush1.msra.mxu0 0.0
    %267 = vmatprep.mubr.f32.mxu0 0.0
    %268 = vmatmul.mubr.f32.gmra.mrb[0].mxu0 %v186
    %v269 = vpop.f32.mrb[0].mxu0
    %v270 = vadd.f32 0.0, %v269
    %v271 = vpop.f32.mrb[0].mxu0
    %272 = vdwg.mxu0
    %273 = vst.msk [vmem:[#allocation2] sm:$0xff] %vm110, %v270
    // Predicated region
    $region22: #{tpu_custom_call.1} parent=1 // pred_check
      _
    $region23: #{tpu_custom_call.1} parent=1 // pred_check_branch
      %275 = sbr.rel (0) target = $region25
    $region24: #{tpu_custom_call.1} parent=1 // pred_region
      %s277 = ssub.s32 128, 128
      %278 = vsyncadd [#allocation3], %s277
      %s280 = sshll.u32 [#allocation2], 4
      %s281 = int_to_ptr.vmem [resolvable:$true] %s280
      %283 = dma.vmem_to_hbm [thread:$0]  %s281, 128, %s5, [#allocation3]
    $region25: #{tpu_custom_call.1} parent=1 // pred_fallthru
      _
    // Predicated region
    $region26: #{tpu_custom_call.1} parent=1 // pred_check
      _
    $region27: #{tpu_custom_call.1} parent=1 // pred_check_branch
      %285 = sbr.rel (0) target = $region29
    $region28: #{tpu_custom_call.1} parent=1 // pred_region
      %286 = dma.done [#allocation3], 128
    $region29: #{tpu_custom_call.1} parent=1 // pred_fallthru
      _
    %287 = vsyncpa [#allocation3], 1

</llo_original>
